<compile_context>
chip_gen: v6e
topology: v6e:2x2x1
jax: 0.10.0
libtpu: 0.0.40
codegen_flags: <defaults>
</compile_context>

<pallas_src>
import jax
import jax.numpy as jnp
from jax.experimental import pallas as pl
from jax.experimental.pallas import tpu as pltpu


def _round_up(a, m):
    return ((a + m - 1) // m) * m


def attack_kernel(xT_ref, lbT_ref, rep_ref, grp_ref, fcK_ref, wd_ref, bd_ref,
                  out_ref):
    # xT_ref : (C, TB)     inputs, batch on lanes
    # lbT_ref: (1, TB)     int32 class labels
    # rep_ref: (C*C, C)    replication matrix: rep[l*C + c, c'] = (c == c')
    # grp_ref: (C*C, 1)    int32 group ids:    grp[l*C + c]     = l
    # fcK_ref: (H, C*C)    fc rearranged:      fcK[j, l*C + c]  = fc[l, c, j]
    # wd_ref : (1, H)      fc2.weight[1] - fc2.weight[0]
    # bd_ref : (1, 1)      fc2.bias[1]   - fc2.bias[0]
    # out_ref: (2, TB)     log-softmax output, batch on lanes
    xT = xT_ref[...]
    lbT = lbT_ref[...]

    # Broadcast x over the C class groups (MXU, K=C): kx[l*C+c, b] = x[b, c].
    kx = jnp.dot(rep_ref[...], xT, preferred_element_type=jnp.float32)   # (C*C, TB)

    # Keep only the rows whose class group matches lb[b] -> Kronecker operand.
    k = jnp.where(grp_ref[...] == lbT, kx, 0.0)                          # (C*C, TB)

    # Single fused contraction (K=C*C): hT[j,b] = sum_c fc[lb[b],c,j] * x[b,c]
    hT = jnp.dot(fcK_ref[...], k, preferred_element_type=jnp.float32)    # (H, TB)
    hT = jnp.maximum(hT, 0.0)                                            # ReLU

    # fc2 + 2-class log_softmax, closed form (no cross-lane reductions):
    #   d = logits[1]-logits[0];  out0 = -softplus(d);  out1 = d - softplus(d)
    d = jnp.dot(wd_ref[...], hT,
                preferred_element_type=jnp.float32) + bd_ref[...]        # (1, TB)
    sp = jnp.maximum(d, 0.0) + jnp.log(1.0 + jnp.exp(-jnp.abs(d)))       # softplus(d)
    out_ref[...] = jnp.concatenate([-sp, d - sp], axis=0)                # (2, TB)


def make_attack_forward(fc, fc2_w, fc2_b, *, block_b=8192):
    """Build the forward fn. Constant operands are precomputed once here."""
    C, C2, H = fc.shape
    assert C == C2
    assert fc2_w.shape == (2, H) and fc2_b.shape == (2,)

    # Tiny constant operands (<= 10 KB total), DMA'd into VMEM once per grid.
    fcK = jnp.transpose(fc.astype(jnp.float32), (2, 0, 1)).reshape(H, C * C)
    rep = jnp.tile(jnp.eye(C, dtype=jnp.float32), (C, 1))                # (C*C, C)
    grp = jnp.repeat(jnp.arange(C, dtype=jnp.int32), C).reshape(C * C, 1)
    wd = (fc2_w[1] - fc2_w[0]).astype(jnp.float32).reshape(1, H)
    bd = (fc2_b[1] - fc2_b[0]).astype(jnp.float32).reshape(1, 1)

    @jax.jit
    def forward(x, lb):
        B = x.shape[0]
        bb = _round_up(min(block_b, _round_up(B, 128)), 128)
        Bp = _round_up(B, bb)

        # Batch-on-lanes layout. The transpose is one tiny XLA pass over x
        # (C = 10 rows); it buys lane-dense loads/stores inside the kernel.
        xT = x.astype(jnp.float32).T                                      # (C, B)
        lbT = lb.astype(jnp.int32).reshape(1, B)
        if Bp != B:
            xT = jnp.pad(xT, ((0, 0), (0, Bp - B)))
            lbT = jnp.pad(lbT, ((0, 0), (0, Bp - B)))   # pad label 0 (valid)

        grid = (Bp // bb,)
        cost = pl.CostEstimate(
            flops=2 * Bp * (C * C * C + H * C * C + H),
            transcendentals=2 * Bp,
            bytes_accessed=4 * (Bp * C + Bp + 2 * Bp
                                + C * C * C + C * C + H * C * C + H + 1),
        )

        outT = pl.pallas_call(
            attack_kernel,
            out_shape=jax.ShapeDtypeStruct((2, Bp), jnp.float32),
            grid=grid,
            in_specs=[
                pl.BlockSpec((C, bb), lambda i: (0, i)),       # xT
                pl.BlockSpec((1, bb), lambda i: (0, i)),       # lbT
                pl.BlockSpec((C * C, C), lambda i: (0, 0)),    # rep (const)
                pl.BlockSpec((C * C, 1), lambda i: (0, 0)),    # grp (const)
                pl.BlockSpec((H, C * C), lambda i: (0, 0)),    # fcK (const)
                pl.BlockSpec((1, H), lambda i: (0, 0)),        # wd  (const)
                pl.BlockSpec((1, 1), lambda i: (0, 0)),        # bd  (const)
            ],
            out_specs=pl.BlockSpec((2, bb), lambda i: (0, i)),
            compiler_params=pltpu.CompilerParams(
                # TODO(synk): on v7x (2 TCs) pltpu.CORE_PARALLEL could split the
                # batch grid across cores; kept "parallel" for portability.
                dimension_semantics=("parallel",),
                vmem_limit_bytes=32 * 1024 * 1024,
            ),
            cost_estimate=cost,
        )(xT, lbT, rep, grp, fcK, wd, bd)

        return outT[:, :B].T                                              # (B, 2)

    return forward


def attack_forward_ref(x, lb, fc, fc2_w, fc2_b):
    """Pure-JAX reference of the PyTorch forward pass."""
    w = fc[lb]                                             # (B, C, H)
    h = jax.nn.relu(jnp.einsum("bc,bch->bh", x, w))        # (B, H)
    logits = h @ fc2_w.T + fc2_b                           # (B, 2)
    return jax.nn.log_softmax(logits, axis=1)


if __name__ == "__main__":
    n_classes = 10
    hidden = 20
    batch = 200   # not a multiple of block_b -> exercises padding + 2-step grid

    key = jax.random.PRNGKey(0)
    k_fc, k_w2, k_b2, k_x, k_lb = jax.random.split(key, 5)

    # Deterministic parameter init (matches the module's __init__ shapes).
    fc = jax.random.normal(k_fc, (n_classes, n_classes, hidden),
                           dtype=jnp.float32) * 0.1                        # (10, 10, 20)
    fc2_w = jax.random.normal(k_w2, (2, hidden), dtype=jnp.float32) * 0.1  # (2, 20)
    fc2_b = jax.random.normal(k_b2, (2,), dtype=jnp.float32) * 0.1         # (2,)

    # Example inputs.
    x = jax.random.normal(k_x, (batch, n_classes), dtype=jnp.float32)      # (200, 10)
    lb = jax.random.randint(k_lb, (batch,), 0, n_classes, dtype=jnp.int32) # (200,)

    fwd = make_attack_forward(fc, fc2_w, fc2_b, block_b=128)
    out = jax.block_until_ready(fwd(x, lb))

    ref = attack_forward_ref(x, lb, fc, fc2_w, fc2_b)
    assert out.shape == (batch, 2) and out.dtype == jnp.float32
    assert jnp.allclose(out, ref, atol=1e-5, rtol=1e-5), "mismatch vs reference"

    print("KERNEL_OK")
</pallas_src>

<mosaic_0001>
module attributes {stable_mosaic.version = 11 : i64} {
  func.func @attack_kernel(%arg0: i32, %arg1: memref<10x128xf32, #tpu.memory_space<vmem>>, %arg2: memref<1x128xi32, #tpu.memory_space<vmem>>, %arg3: memref<100x10xf32, #tpu.memory_space<vmem>>, %arg4: memref<100x1xi32, #tpu.memory_space<vmem>>, %arg5: memref<20x100xf32, #tpu.memory_space<vmem>>, %arg6: memref<1x20xf32, #tpu.memory_space<vmem>>, %arg7: memref<1x1xf32, #tpu.memory_space<vmem>>, %arg8: memref<2x128xf32, #tpu.memory_space<vmem>>) attributes {dimension_semantics = [#tpu.dimension_semantics<parallel>], iteration_bounds = array<i64: 2>, scalar_prefetch = 0 : i64, scratch_operands = 0 : i64, tpu.core_type = #tpu.core_type<tc>, window_params = [{transform_indices = @transform_0, window_bounds = array<i64: 10, 128>}, {transform_indices = @transform_1, window_bounds = array<i64: 1, 128>}, {pipeline_mode = #tpu.pipeline_mode<synchronous>, transform_indices = @transform_2, window_bounds = array<i64: 100, 10>}, {pipeline_mode = #tpu.pipeline_mode<synchronous>, transform_indices = @transform_3, window_bounds = array<i64: 100, 1>}, {pipeline_mode = #tpu.pipeline_mode<synchronous>, transform_indices = @transform_4, window_bounds = array<i64: 20, 100>}, {pipeline_mode = #tpu.pipeline_mode<synchronous>, transform_indices = @transform_5, window_bounds = array<i64: 1, 20>}, {pipeline_mode = #tpu.pipeline_mode<synchronous>, transform_indices = @transform_6, window_bounds = array<i64: 1, 1>}, {transform_indices = @transform_7, window_bounds = array<i64: 2, 128>}]} {
    %c0 = arith.constant 0 : index
    %c0_0 = arith.constant 0 : index
    %0 = vector.load %arg1[%c0, %c0_0] : memref<10x128xf32, #tpu.memory_space<vmem>>, vector<10x128xf32>
    %c0_1 = arith.constant 0 : index
    %c0_2 = arith.constant 0 : index
    %1 = vector.load %arg2[%c0_1, %c0_2] : memref<1x128xi32, #tpu.memory_space<vmem>>, vector<1x128xi32>
    %c0_3 = arith.constant 0 : index
    %c0_4 = arith.constant 0 : index
    %2 = vector.load %arg3[%c0_3, %c0_4] : memref<100x10xf32, #tpu.memory_space<vmem>>, vector<100x10xf32>
    %cst = arith.constant dense<0.000000e+00> : vector<100x128xf32>
    %3 = tpu.matmul %2, %0, %cst {dimension_numbers = #tpu.dot_dimension_numbers<[1], [0], [0], [1], [0, 0, 1, 1], [], []>} : vector<100x10xf32>, vector<10x128xf32>, vector<100x128xf32> -> vector<100x128xf32>
    %c0_5 = arith.constant 0 : index
    %c0_6 = arith.constant 0 : index
    %4 = vector.load %arg4[%c0_5, %c0_6] : memref<100x1xi32, #tpu.memory_space<vmem>>, vector<100x1xi32>
    %5 = vector.broadcast %4 : vector<100x1xi32> to vector<100x128xi32>
    %6 = vector.broadcast %1 : vector<1x128xi32> to vector<100x128xi32>
    %7 = arith.cmpi eq, %5, %6 : vector<100x128xi32>
    %cst_7 = arith.constant 0.000000e+00 : f32
    %8 = vector.broadcast %cst_7 : f32 to vector<100x128xf32>
    %9 = arith.select %7, %3, %8 : vector<100x128xi1>, vector<100x128xf32>
    %c0_8 = arith.constant 0 : index
    %c0_9 = arith.constant 0 : index
    %10 = vector.load %arg5[%c0_8, %c0_9] : memref<20x100xf32, #tpu.memory_space<vmem>>, vector<20x100xf32>
    %cst_10 = arith.constant dense<0.000000e+00> : vector<20x128xf32>
    %11 = tpu.matmul %10, %9, %cst_10 {dimension_numbers = #tpu.dot_dimension_numbers<[1], [0], [0], [1], [0, 0, 1, 1], [], []>} : vector<20x100xf32>, vector<100x128xf32>, vector<20x128xf32> -> vector<20x128xf32>
    %cst_11 = arith.constant 0.000000e+00 : f32
    %12 = vector.broadcast %cst_11 : f32 to vector<20x128xf32>
    %13 = arith.maximumf %11, %12 : vector<20x128xf32>
    %c0_12 = arith.constant 0 : index
    %c0_13 = arith.constant 0 : index
    %14 = vector.load %arg6[%c0_12, %c0_13] : memref<1x20xf32, #tpu.memory_space<vmem>>, vector<1x20xf32>
    %cst_14 = arith.constant dense<0.000000e+00> : vector<1x128xf32>
    %15 = tpu.matmul %14, %13, %cst_14 {dimension_numbers = #tpu.dot_dimension_numbers<[1], [0], [0], [1], [0, 0, 1, 1], [], []>} : vector<1x20xf32>, vector<20x128xf32>, vector<1x128xf32> -> vector<1x128xf32>
    %c0_15 = arith.constant 0 : index
    %c0_16 = arith.constant 0 : index
    %16 = vector.load %arg7[%c0_15, %c0_16] : memref<1x1xf32, #tpu.memory_space<vmem>>, vector<1x1xf32>
    %17 = vector.broadcast %16 : vector<1x1xf32> to vector<1x128xf32>
    %18 = arith.addf %15, %17 : vector<1x128xf32>
    %cst_17 = arith.constant 0.000000e+00 : f32
    %19 = vector.broadcast %cst_17 : f32 to vector<1x128xf32>
    %20 = arith.maximumf %18, %19 : vector<1x128xf32>
    %21 = math.absf %18 : vector<1x128xf32>
    %cst_18 = arith.constant 0.000000e+00 : f32
    %22 = vector.broadcast %cst_18 : f32 to vector<1x128xf32>
    %23 = arith.subf %22, %21 : vector<1x128xf32>
    %24 = math.exp %23 : vector<1x128xf32>
    %cst_19 = arith.constant 1.000000e+00 : f32
    %25 = vector.broadcast %cst_19 : f32 to vector<1x128xf32>
    %26 = arith.addf %25, %24 : vector<1x128xf32>
    %27 = math.log %26 : vector<1x128xf32>
    %28 = arith.addf %20, %27 : vector<1x128xf32>
    %cst_20 = arith.constant 0.000000e+00 : f32
    %29 = vector.broadcast %cst_20 : f32 to vector<1x128xf32>
    %30 = arith.subf %29, %28 : vector<1x128xf32>
    %31 = arith.subf %18, %28 : vector<1x128xf32>
    %32 = tpu.concatenate %30, %31 in 0 : vector<1x128xf32>, vector<1x128xf32> -> vector<2x128xf32>
    %c0_21 = arith.constant 0 : index
    %c0_22 = arith.constant 0 : index
    %33 = vector.load %arg8[%c0_21, %c0_22] : memref<2x128xf32, #tpu.memory_space<vmem>>, vector<2x128xf32>
    tpu.vector_store %arg8[%c0_21, %c0_22], %32 {strides = array<i32>} : memref<2x128xf32, #tpu.memory_space<vmem>>, vector<2x128xf32>,
    return
  }
  func.func @transform_0(%arg0: i32) -> (i32, i32) {
    %c0_i32 = arith.constant 0 : i32
    %c0_i32_0 = arith.constant 0 : i32
    return %c0_i32, %arg0 : i32, i32
  }
  func.func @transform_1(%arg0: i32) -> (i32, i32) {
    %c0_i32 = arith.constant 0 : i32
    %c0_i32_0 = arith.constant 0 : i32
    return %c0_i32, %arg0 : i32, i32
  }
  func.func @transform_2(%arg0: i32) -> (i32, i32) {
    %c0_i32 = arith.constant 0 : i32
    %c0_i32_0 = arith.constant 0 : i32
    %c0_i32_1 = arith.constant 0 : i32
    return %c0_i32, %c0_i32_0 : i32, i32
  }
  func.func @transform_3(%arg0: i32) -> (i32, i32) {
    %c0_i32 = arith.constant 0 : i32
    %c0_i32_0 = arith.constant 0 : i32
    %c0_i32_1 = arith.constant 0 : i32
    return %c0_i32, %c0_i32_0 : i32, i32
  }
  func.func @transform_4(%arg0: i32) -> (i32, i32) {
    %c0_i32 = arith.constant 0 : i32
    %c0_i32_0 = arith.constant 0 : i32
    %c0_i32_1 = arith.constant 0 : i32
    return %c0_i32, %c0_i32_0 : i32, i32
  }
  func.func @transform_5(%arg0: i32) -> (i32, i32) {
    %c0_i32 = arith.constant 0 : i32
    %c0_i32_0 = arith.constant 0 : i32
    %c0_i32_1 = arith.constant 0 : i32
    return %c0_i32, %c0_i32_0 : i32, i32
  }
  func.func @transform_6(%arg0: i32) -> (i32, i32) {
    %c0_i32 = arith.constant 0 : i32
    %c0_i32_0 = arith.constant 0 : i32
    %c0_i32_1 = arith.constant 0 : i32
    return %c0_i32, %c0_i32_0 : i32, i32
  }
  func.func @transform_7(%arg0: i32) -> (i32, i32) {
    %c0_i32 = arith.constant 0 : i32
    %c0_i32_0 = arith.constant 0 : i32
    return %c0_i32, %arg0 : i32, i32
  }
}

</mosaic_0001>

<llo_original>
// kernel: forward.1
$region0: #{forward.1}
  #allocation0 [shape = 'u32[]', space=smem, size = 0x4, offset = 0x4, fixed_abs, tag = 'smem constant byte address 0x4 - core index']
  #allocation1 [shape = 'u32[144,128]{1,0:T(1,128)}', space=vmem, size = 0x12000, scoped, tag = 'internal scratch']
  #allocation2 [shape = 'f32[1,1]{1,0:T(1,128)S(1)}', space=vmem, size = 0x200, scoped, tag = 'scoped memory for forward.1']
  %s0 = inlined_call_operand.vmem [shape: f32[10,256], index: 0, kind: input, shape index: {}]
  %s1 = inlined_call_operand.vmem [shape: s32[1,256], index: 1, kind: input, shape index: {}]
  %s2 = inlined_call_operand.hbm [shape: f32[100,10], index: 2, kind: input, shape index: {}]
  %s3 = inlined_call_operand.hbm [shape: s32[100,1], index: 3, kind: input, shape index: {}]
  %s4 = inlined_call_operand.vmem [shape: f32[20,100], index: 4, kind: input, shape index: {}]
  %s5 = inlined_call_operand.vmem [shape: f32[1,20], index: 5, kind: input, shape index: {}]
  %s6 = inlined_call_operand.<no memory space> [shape: f32[1,1], index: 6, kind: input, shape index: {}]
  %s7 = inlined_call_operand.vmem [shape: f32[2,256], index: 7, kind: output, shape index: {}]
  %s8 = sld [smem:[#allocation0]]
  $region107: #{forward.1} parent=0
    _
  %s10 = ssub.s32 1, %s8
  %s11 = scalar_select 0, %s10, %s8
  %v12 = vstv %s6
  %13 = vst [vmem:[#allocation2] sm:$0x1] %v12
  $region1: #{forward.1} parent=0
    #allocation3 [shape = 'u8[16384]{0}', space=vmem, size = 0x4000, scoped, tag = 'input window, operand 0']
    #allocation4 [shape = 'u8[53248]{0}', space=vmem, size = 0xd000, scoped, tag = 'input window, operand 2, single buffered']
    #allocation5 [shape = 's32[2]{0}', space=sflag, size = 0x8, scoped, tag = 'scoped memory for forward.1']
    #allocation6 [shape = 'u8[53248]{0}', space=vmem, size = 0xd000, scoped, tag = 'input window, operand 3, single buffered']
    #allocation7 [shape = 's32[1]{0}', space=sflag, size = 0x4, scoped, tag = 'scoped memory for forward.1']
    %14 = vsyncpa [#allocation5], 0
    %15 = vsyncpa [#allocation7], 0
    loop: start=0, step=1, limit=4
    $region2: #{forward.1} parent=1 // loop_pre_header
      _
    $region3: #{forward.1} parent=1 // loop_header
      %s17 = sphi 0, %s21
      %p18 = scmp.ge.s32.totalorder %s17, 4
      %s27 = sphi 0, %s29
      %s30 = sphi 0, %s27
      %s31 = sphi 0, %s30
      %s47 = sphi 0, %s31
      %s53 = sphi 0, %s55
      %s56 = sphi 0, %s53
      %s57 = sphi 0, %s56
      %s73 = sphi 0, %s57
      %s77 = sphi 0, %s77
      %s79 = sphi 0, %s77
      %s80 = sphi 0, %s79
      %s94 = sphi 0, %s80
      %s98 = sphi 0, %s98
      %s100 = sphi 0, %s98
      %s101 = sphi 0, %s100
      %s115 = sphi 0, %s101
      %s119 = sphi 0, %s119
      %s121 = sphi 0, %s119
      %s122 = sphi 0, %s121
      %s136 = sphi 0, %s122
      %s140 = sphi 0, %s140
      %s142 = sphi 0, %s140
      %s143 = sphi 0, %s142
      %s157 = sphi 0, %s143
      %s161 = sphi 0, %s161
      %s163 = sphi 0, %s161
      %s164 = sphi 0, %s163
      %s178 = sphi 0, %s164
      %s184 = sphi 0, %s186
      %s187 = sphi 0, %s184
      %s188 = sphi 0, %s187
      %s204 = sphi 0, %s188
    $region4: #{forward.1} parent=1 // loop_header_branch
      %20 = sbr.rel (%p18) target = $region8
    $region5: #{forward.1} parent=1 // loop_body
      %s22 = ssub.s32 %s17, 1
      %s23 = ssub.s32 %s17, 2
      %s24 = sadd.s32 %s17, 1
      %s25 = ssub.s32 %s17, %s24
      %p26 = scmp.eq.s32.totalorder %s25, 0
      %s28 = sadd.s32 %s27, 1
      %s29 = scalar_select %p26, %s27, %s28
      %p32 = pneg %p26
      %p33 = scmp.eq.s32.totalorder %s17, 1
      %p34 = por %p32, %p33
      %p35 = scmp.ne.s32.totalorder %s27, %s30
      %p36 = scmp.eq.s32.totalorder %s17, 0
      %p37 = por %p35, %p36
      %p38 = scmp.ne.s32.totalorder %s27, %s30
      %p39 = scmp.eq.s32.totalorder %s22, 1
      %p40 = por %p38, %p39
      %p41 = scmp.ne.s32.totalorder %s30, %s31
      %p42 = scmp.eq.s32.totalorder %s22, 0
      %p43 = por %p41, %p42
      %p44 = scmp.ne.s32.totalorder %s30, %s31
      %p45 = scmp.eq.s32.totalorder %s23, 1
      %p46 = por %p44, %p45
      %p48 = scmp.ne.s32.totalorder %s31, %s47
      %p49 = scmp.eq.s32.totalorder %s23, 0
      %p50 = por %p48, %p49
      %s51 = ssub.s32 %s17, %s24
      %p52 = scmp.eq.s32.totalorder %s51, 0
      %s54 = sadd.s32 %s53, 1
      %s55 = scalar_select %p52, %s53, %s54
      %p58 = pneg %p52
      %p59 = scmp.eq.s32.totalorder %s17, 1
      %p60 = por %p58, %p59
      %p61 = scmp.ne.s32.totalorder %s53, %s56
      %p62 = scmp.eq.s32.totalorder %s17, 0
      %p63 = por %p61, %p62
      %p64 = scmp.ne.s32.totalorder %s53, %s56
      %p65 = scmp.eq.s32.totalorder %s22, 1
      %p66 = por %p64, %p65
      %p67 = scmp.ne.s32.totalorder %s56, %s57
      %p68 = scmp.eq.s32.totalorder %s22, 0
      %p69 = por %p67, %p68
      %p70 = scmp.ne.s32.totalorder %s56, %s57
      %p71 = scmp.eq.s32.totalorder %s23, 1
      %p72 = por %p70, %p71
      %p74 = scmp.ne.s32.totalorder %s57, %s73
      %p75 = scmp.eq.s32.totalorder %s23, 0
      %p76 = por %p74, %p75
      %s78 = sadd.s32 %s77, 1
      %p81 = scmp.eq.s32.totalorder %s17, 1
      %p82 = scmp.ne.s32.totalorder %s77, %s79
      %p83 = scmp.eq.s32.totalorder %s17, 0
      %p84 = por %p82, %p83
      %p85 = scmp.ne.s32.totalorder %s77, %s79
      %p86 = scmp.eq.s32.totalorder %s22, 1
      %p87 = por %p85, %p86
      %p88 = scmp.ne.s32.totalorder %s79, %s80
      %p89 = scmp.eq.s32.totalorder %s22, 0
      %p90 = por %p88, %p89
      %p91 = scmp.ne.s32.totalorder %s79, %s80
      %p92 = scmp.eq.s32.totalorder %s23, 1
      %p93 = por %p91, %p92
      %p95 = scmp.ne.s32.totalorder %s80, %s94
      %p96 = scmp.eq.s32.totalorder %s23, 0
      %p97 = por %p95, %p96
      %s99 = sadd.s32 %s98, 1
      %p102 = scmp.eq.s32.totalorder %s17, 1
      %p103 = scmp.ne.s32.totalorder %s98, %s100
      %p104 = scmp.eq.s32.totalorder %s17, 0
      %p105 = por %p103, %p104
      %p106 = scmp.ne.s32.totalorder %s98, %s100
      %p107 = scmp.eq.s32.totalorder %s22, 1
      %p108 = por %p106, %p107
      %p109 = scmp.ne.s32.totalorder %s100, %s101
      %p110 = scmp.eq.s32.totalorder %s22, 0
      %p111 = por %p109, %p110
      %p112 = scmp.ne.s32.totalorder %s100, %s101
      %p113 = scmp.eq.s32.totalorder %s23, 1
      %p114 = por %p112, %p113
      %p116 = scmp.ne.s32.totalorder %s101, %s115
      %p117 = scmp.eq.s32.totalorder %s23, 0
      %p118 = por %p116, %p117
      %s120 = sadd.s32 %s119, 1
      %p123 = scmp.eq.s32.totalorder %s17, 1
      %p124 = scmp.ne.s32.totalorder %s119, %s121
      %p125 = scmp.eq.s32.totalorder %s17, 0
      %p126 = por %p124, %p125
      %p127 = scmp.ne.s32.totalorder %s119, %s121
      %p128 = scmp.eq.s32.totalorder %s22, 1
      %p129 = por %p127, %p128
      %p130 = scmp.ne.s32.totalorder %s121, %s122
      %p131 = scmp.eq.s32.totalorder %s22, 0
      %p132 = por %p130, %p131
      %p133 = scmp.ne.s32.totalorder %s121, %s122
      %p134 = scmp.eq.s32.totalorder %s23, 1
      %p135 = por %p133, %p134
      %p137 = scmp.ne.s32.totalorder %s122, %s136
      %p138 = scmp.eq.s32.totalorder %s23, 0
      %p139 = por %p137, %p138
      %s141 = sadd.s32 %s140, 1
      %p144 = scmp.eq.s32.totalorder %s17, 1
      %p145 = scmp.ne.s32.totalorder %s140, %s142
      %p146 = scmp.eq.s32.totalorder %s17, 0
      %p147 = por %p145, %p146
      %p148 = scmp.ne.s32.totalorder %s140, %s142
      %p149 = scmp.eq.s32.totalorder %s22, 1
      %p150 = por %p148, %p149
      %p151 = scmp.ne.s32.totalorder %s142, %s143
      %p152 = scmp.eq.s32.totalorder %s22, 0
      %p153 = por %p151, %p152
      %p154 = scmp.ne.s32.totalorder %s142, %s143
      %p155 = scmp.eq.s32.totalorder %s23, 1
      %p156 = por %p154, %p155
      %p158 = scmp.ne.s32.totalorder %s143, %s157
      %p159 = scmp.eq.s32.totalorder %s23, 0
      %p160 = por %p158, %p159
      %s162 = sadd.s32 %s161, 1
      %p165 = scmp.eq.s32.totalorder %s17, 1
      %p166 = scmp.ne.s32.totalorder %s161, %s163
      %p167 = scmp.eq.s32.totalorder %s17, 0
      %p168 = por %p166, %p167
      %p169 = scmp.ne.s32.totalorder %s161, %s163
      %p170 = scmp.eq.s32.totalorder %s22, 1
      %p171 = por %p169, %p170
      %p172 = scmp.ne.s32.totalorder %s163, %s164
      %p173 = scmp.eq.s32.totalorder %s22, 0
      %p174 = por %p172, %p173
      %p175 = scmp.ne.s32.totalorder %s163, %s164
      %p176 = scmp.eq.s32.totalorder %s23, 1
      %p177 = por %p175, %p176
      %p179 = scmp.ne.s32.totalorder %s164, %s178
      %p180 = scmp.eq.s32.totalorder %s23, 0
      %p181 = por %p179, %p180
      %s182 = ssub.s32 %s17, %s24
      %p183 = scmp.eq.s32.totalorder %s182, 0
      %s185 = sadd.s32 %s184, 1
      %s186 = scalar_select %p183, %s184, %s185
      %p189 = pneg %p183
      %p190 = scmp.eq.s32.totalorder %s17, 1
      %p191 = por %p189, %p190
      %p192 = scmp.ne.s32.totalorder %s184, %s187
      %p193 = scmp.eq.s32.totalorder %s17, 0
      %p194 = por %p192, %p193
      %p195 = scmp.ne.s32.totalorder %s184, %s187
      %p196 = scmp.eq.s32.totalorder %s22, 1
      %p197 = por %p195, %p196
      %p198 = scmp.ne.s32.totalorder %s187, %s188
      %p199 = scmp.eq.s32.totalorder %s22, 0
      %p200 = por %p198, %p199
      %p201 = scmp.ne.s32.totalorder %s187, %s188
      %p202 = scmp.eq.s32.totalorder %s23, 1
      %p203 = por %p201, %p202
      %p205 = scmp.ne.s32.totalorder %s188, %s204
      %p206 = scmp.eq.s32.totalorder %s23, 0
      %p207 = por %p205, %p206
      %p208 = scmp.le.s32.totalorder 1, %s17
      %p209 = scmp.lt.s32.totalorder %s17, 3
      %p210 = pnand %p208, %p209
      %p211 = pneg %p210
      // Predicated region
      $region9: #{forward.1} parent=5 // pred_check
        _
      $region10: #{forward.1} parent=5 // pred_check_branch
        %213 = sbr.rel (%p210) target = $region12
      $region11: #{forward.1} parent=5 // pred_region
        %s214 = ssub.s32 %s17, 1
        // Predicated region
        $region13: #{forward.1} parent=11 // pred_check
          %p215 = pneg %p90
        $region14: #{forward.1} parent=11 // pred_check_branch
          %217 = sbr.rel (%p215) target = $region16
        $region15: #{forward.1} parent=11 // pred_region
          %s219 = ssub.s32 1664, 1664
          %220 = vsyncadd [#allocation5], %s219
          %s221 = sshll.u32 [#allocation4], 4
          %s222 = int_to_ptr.vmem [resolvable:$true] %s221
          %227 = dma.hbm_to_vmem [thread:$0]  %s2, 1664, %s222, [#allocation5], 128, 128, 8
        $region16: #{forward.1} parent=11 // pred_fallthru
          _
        // Predicated region
        $region17: #{forward.1} parent=11 // pred_check
          %p228 = pneg %p111
        $region18: #{forward.1} parent=11 // pred_check_branch
          %230 = sbr.rel (%p228) target = $region20
        $region19: #{forward.1} parent=11 // pred_region
          %s232 = ssub.s32 1664, 1664
          %233 = vsyncadd [#allocation7], %s232
          %s234 = sshll.u32 [#allocation6], 4
          %s235 = int_to_ptr.vmem [resolvable:$true] %s234
          %240 = dma.hbm_to_vmem [thread:$0]  %s3, 1664, %s235, [#allocation7], 128, 128, 8
        $region20: #{forward.1} parent=11 // pred_fallthru
          _
        // Predicated region
        $region21: #{forward.1} parent=11 // pred_check
          %p241 = pneg %p132
        $region22: #{forward.1} parent=11 // pred_check_branch
          %243 = sbr.rel (%p241) target = $region24
        $region23: #{forward.1} parent=11 // pred_region
          _
        $region24: #{forward.1} parent=11 // pred_fallthru
          _
        // Predicated region
        $region25: #{forward.1} parent=11 // pred_check
          %p244 = pneg %p153
        $region26: #{forward.1} parent=11 // pred_check_branch
          %246 = sbr.rel (%p244) target = $region28
        $region27: #{forward.1} parent=11 // pred_region
          _
        $region28: #{forward.1} parent=11 // pred_fallthru
          _
        // Predicated region
        $region29: #{forward.1} parent=11 // pred_check
          %p247 = pneg %p174
        $region30: #{forward.1} parent=11 // pred_check_branch
          %249 = sbr.rel (%p247) target = $region32
        $region31: #{forward.1} parent=11 // pred_region
          _
        $region32: #{forward.1} parent=11 // pred_fallthru
          _
      $region12: #{forward.1} parent=5 // pred_fallthru
        _
      %p250 = scmp.lt.s32.totalorder %s17, 2
      // Predicated region
      $region33: #{forward.1} parent=5 // pred_check
        %p251 = pneg %p250
      $region34: #{forward.1} parent=5 // pred_check_branch
        %253 = sbr.rel (%p251) target = $region36
      $region35: #{forward.1} parent=5 // pred_region
        // Predicated region
        $region37: #{forward.1} parent=35 // pred_check
          %p254 = pneg %p37
        $region38: #{forward.1} parent=35 // pred_check_branch
          %256 = sbr.rel (%p254) target = $region40
        $region39: #{forward.1} parent=35 // pred_region
          %s257 = sand.u32 %s27, 1
          %s258 = sand.u32 %s27, 1
          %s259 = smul.addr %s258, 16
          %s260 = scalar_lea.vmem [#allocation3], %s259
          %s261 = smul.addr %s17, 8
          %s262 = scalar_lea.vmem %s0, %s261
          // Predicated region
          $region41: #{forward.1} parent=39 // pred_check
            _
          $region42: #{forward.1} parent=39 // pred_check_branch
            %264 = sbr.rel (0) target = $region44
          $region43: #{forward.1} parent=39 // pred_region
            // Predicated region
            $region45: #{forward.1} parent=43 // pred_check
              _
            $region46: #{forward.1} parent=43 // pred_check_branch
              %266 = sbr.rel (0) target = $region48
            $region47: #{forward.1} parent=43 // pred_region
              // Predicated region
              $region60: #{forward.1} parent=47 // pred_check
                _
              $region61: #{forward.1} parent=47 // pred_check_branch
                %284 = sbr.rel (0) target = $region63
              $region62: #{forward.1} parent=47 // pred_region
                loop: start=0, step=1, limit=1
                $region64: #{forward.1} parent=62 // loop_pre_header
                  _
                $region65: #{forward.1} parent=62 // loop_header
                  %s286 = sphi 0, %s290
                  %p287 = scmp.ge.s32.totalorder %s286, 1
                  %s291 = sphi %s262, %s262
                  %s292 = sphi %s260, %s260
                $region66: #{forward.1} parent=62 // loop_header_branch
                  %289 = sbr.rel (%p287) target = $region70
                $region67: #{forward.1} parent=62 // loop_body
                  %v293 = vld [vmem:[%s291] sm:$0xff]
                  %294 = vst [vmem:[%s292] sm:$0xff] %v293
                  %v295 = vld [vmem:[%s291 + $0x10] sm:$0xff]
                  %296 = vst [vmem:[%s292 + $0x8] sm:$0xff] %v295
                $region68: #{forward.1} parent=62 // loop_footer
                  %s290 = sadd.s32 1, %s286
                $region69: #{forward.1} parent=62 // loop_footer_branch
                  %285 = sbr.rel target = $region65
                $region70: #{forward.1} parent=62 // loop_exit
                  _
              $region63: #{forward.1} parent=47 // pred_fallthru
                _
              // Predicated region
              $region71: #{forward.1} parent=47 // pred_check
                _
              $region72: #{forward.1} parent=47 // pred_check_branch
                %298 = sbr.rel target = $region74
              $region73: #{forward.1} parent=47 // pred_region
                _
              $region74: #{forward.1} parent=47 // pred_fallthru
                _
            $region48: #{forward.1} parent=43 // pred_fallthru
              _
            // Predicated region
            $region49: #{forward.1} parent=43 // pred_check
              _
            $region50: #{forward.1} parent=43 // pred_check_branch
              %268 = sbr.rel target = $region52
            $region51: #{forward.1} parent=43 // pred_region
              %s270 = ssub.s32 256, 1
              loop: start=0, step=1, limit=1
              $region53: #{forward.1} parent=51 // loop_pre_header
                _
              $region54: #{forward.1} parent=51 // loop_header
                %s272 = sphi 0, %s276
                %p273 = scmp.ge.s32.totalorder %s272, 1
                %s277 = sphi %s262, %s262
                %s278 = sphi %s260, %s260
              $region55: #{forward.1} parent=51 // loop_header_branch
                %275 = sbr.rel (%p273) target = $region59
              $region56: #{forward.1} parent=51 // loop_body
                %v279 = vld [vmem:[%s277] sm:%s270]
                %280 = vst [vmem:[%s278] sm:%s270] %v279
                %v281 = vld [vmem:[%s277 + $0x10] sm:%s270]
                %282 = vst [vmem:[%s278 + $0x8] sm:%s270] %v281
              $region57: #{forward.1} parent=51 // loop_footer
                %s276 = sadd.s32 1, %s272
              $region58: #{forward.1} parent=51 // loop_footer_branch
                %271 = sbr.rel target = $region54
              $region59: #{forward.1} parent=51 // loop_exit
                _
            $region52: #{forward.1} parent=43 // pred_fallthru
              _
          $region44: #{forward.1} parent=39 // pred_fallthru
            _
          %299 = vnop
        $region40: #{forward.1} parent=35 // pred_fallthru
          _
        // Predicated region
        $region75: #{forward.1} parent=35 // pred_check
          %p300 = pneg %p63
        $region76: #{forward.1} parent=35 // pred_check_branch
          %302 = sbr.rel (%p300) target = $region78
        $region77: #{forward.1} parent=35 // pred_region
          %p303 = scmp.lt.s32.totalorder %s17, 1
          %s304 = scalar_select %p303, %s17, 1
          %s305 = scalar_lea.vmem %s1, %s304
        $region78: #{forward.1} parent=35 // pred_fallthru
          _
      $region36: #{forward.1} parent=5 // pred_fallthru
        _
      %p306 = scmp.le.s32.totalorder 1, %s17
      %p307 = scmp.lt.s32.totalorder %s17, 3
      %p308 = pnand %p306, %p307
      %p309 = pneg %p308
      // Predicated region
      $region79: #{forward.1} parent=5 // pred_check
        _
      $region80: #{forward.1} parent=5 // pred_check_branch
        %311 = sbr.rel (%p308) target = $region82
      $region81: #{forward.1} parent=5 // pred_region
        %s312 = ssub.s32 %s17, 1
        %s313 = sand.u32 %s30, 1
        %s314 = sand.u32 %s30, 1
        %s315 = smul.addr %s314, 16
        %s316 = scalar_lea.vmem [#allocation3], %s315
        // Predicated region
        $region83: #{forward.1} parent=81 // pred_check
          %p317 = pneg %p43
        $region84: #{forward.1} parent=81 // pred_check_branch
          %319 = sbr.rel (%p317) target = $region86
        $region85: #{forward.1} parent=81 // pred_region
          _
        $region86: #{forward.1} parent=81 // pred_fallthru
          _
        // Predicated region
        $region87: #{forward.1} parent=81 // pred_check
          %p320 = pneg %p90
        $region88: #{forward.1} parent=81 // pred_check_branch
          %322 = sbr.rel (%p320) target = $region90
        $region89: #{forward.1} parent=81 // pred_region
          %323 = dma.done [#allocation5], 1664
        $region90: #{forward.1} parent=81 // pred_fallthru
          _
        // Predicated region
        $region91: #{forward.1} parent=81 // pred_check
          %p324 = pneg %p111
        $region92: #{forward.1} parent=81 // pred_check_branch
          %326 = sbr.rel (%p324) target = $region94
        $region93: #{forward.1} parent=81 // pred_region
          %327 = dma.done [#allocation7], 1664
        $region94: #{forward.1} parent=81 // pred_fallthru
          _
        %s328 = sand.u32 %s30, 1
        %s329 = sand.u32 %s30, 1
        %s330 = smul.addr %s329, 16
        %s331 = scalar_lea.vmem [#allocation3], %s330
        %p332 = pneg %p43
        %p333 = pneg %p40
        %p334 = scmp.lt.s32.totalorder %s22, 1
        %s335 = scalar_select %p334, %s22, 1
        %s336 = scalar_lea.vmem %s1, %s335
        %p337 = pneg %p69
        %p338 = pneg %p66
        %p339 = pneg %p90
        %p340 = pneg %p87
        %p341 = pneg %p111
        %p342 = pneg %p108
        %p343 = pneg %p132
        %p344 = pneg %p129
        %p345 = pneg %p153
        %p346 = pneg %p150
        %p347 = pneg %p174
        %p348 = pneg %p171
        %p349 = pneg %p200
        %p350 = pneg %p197
        %p351 = scmp.lt.s32.totalorder %s22, 1
        %s352 = scalar_select %p351, %s22, 1
        %s353 = smul.addr %s352, 2
        %s354 = scalar_lea.vmem %s7, %s353
        %p355 = scmp.lt.s32.totalorder %s22, 1
        %s356 = scalar_select %p355, %s22, 1
        %s357 = scalar_lea.vmem %s1, %s356
        %p358 = scmp.lt.s32.totalorder %s22, 1
        %s359 = scalar_select %p358, %s22, 1
        %s360 = smul.addr %s359, 2
        %s361 = scalar_lea.vmem %s7, %s360
        %v362 = vld [vmem:[%s316] sm:$0xff]
        %v363 = vld [vmem:[%s316 + $0x8] sm:$0x3]
        %v364 = vld [vmem:[%s357] sm:$0x1]
        %v365 = vld [vmem:[#allocation4] sm:$0xff]
        %v366 = vld [vmem:[#allocation4 + $0x8] sm:$0xff]
        %v367 = vld [vmem:[#allocation4 + $0x10] sm:$0xff]
        %v368 = vld [vmem:[#allocation4 + $0x18] sm:$0xff]
        %v369 = vld [vmem:[#allocation4 + $0x20] sm:$0xff]
        %v370 = vld [vmem:[#allocation4 + $0x28] sm:$0xff]
        %v371 = vld [vmem:[#allocation4 + $0x30] sm:$0xff]
        %v372 = vld [vmem:[#allocation4 + $0x38] sm:$0xff]
        %v373 = vld [vmem:[#allocation4 + $0x40] sm:$0xff]
        %v374 = vld [vmem:[#allocation4 + $0x48] sm:$0xff]
        %v375 = vld [vmem:[#allocation4 + $0x50] sm:$0xff]
        %v376 = vld [vmem:[#allocation4 + $0x58] sm:$0xff]
        %v377 = vld [vmem:[#allocation4 + $0x60] sm:$0xf]
        %vm378 = vcmask 80896
        %v380 = vsel %vm378, %v365, 0
        %v383 = vsel %vm378, %v366, 0
        %v386 = vsel %vm378, %v367, 0
        %v389 = vsel %vm378, %v368, 0
        %v392 = vsel %vm378, %v369, 0
        %v395 = vsel %vm378, %v370, 0
        %v398 = vsel %vm378, %v371, 0
        %v401 = vsel %vm378, %v372, 0
        %v404 = vsel %vm378, %v373, 0
        %v407 = vsel %vm378, %v374, 0
        %v410 = vsel %vm378, %v375, 0
        %v413 = vsel %vm378, %v376, 0
        %v416 = vsel %vm378, %v377, 0
        %vm418 = vcmask 1041408
        %v420 = vsel %vm418, %v363, 0
        %422 = vmatprep.subr.mxu0 0.0
        %423 = vmatpush1.msra.mxu0 0.0
        %424 = vmatprep.subr.mxu0 0.0
        %425 = vmatpush1.msra.mxu0 0.0
        %426 = vmatprep.subr.mxu0 0.0
        %427 = vmatpush1.msra.mxu0 0.0
        %428 = vmatprep.subr.mxu0 0.0
        %429 = vmatpush1.msra.mxu0 0.0
        %430 = vmatprep.subr.mxu0 0.0
        %431 = vmatpush1.msra.mxu0 0.0
        %432 = vmatprep.subr.mxu0 0.0
        %433 = vmatpush1.msra.mxu0 0.0
        %434 = vmatprep.subr.mxu0 0.0
        %435 = vmatpush1.msra.mxu0 0.0
        %436 = vmatprep.subr.mxu0 0.0
        %437 = vmatpush1.msra.mxu0 0.0
        %438 = vmatprep.subr.mxu0 0.0
        %439 = vmatpush1.msra.mxu0 0.0
        %440 = vmatprep.subr.mxu0 0.0
        %441 = vmatpush1.msra.mxu0 0.0
        %442 = vmatprep.subr.mxu0 0.0
        %443 = vmatpush1.msra.mxu0 0.0
        %444 = vmatprep.subr.mxu0 0.0
        %445 = vmatpush1.msra.mxu0 0.0
        %446 = vmatprep.subr.mxu0 0.0
        %447 = vmatpush1.msra.mxu0 0.0
        %448 = vmatprep.subr.mxu0 0.0
        %449 = vmatpush1.msra.mxu0 0.0
        %450 = vmatprep.subr.mxu0 0.0
        %451 = vmatpush1.msra.mxu0 %v420
        %452 = vmatprep.subr.mxu0 0.0
        %453 = vmatpush1.msra.mxu0 %v362
        %454 = vmatprep.subr.mxu0 0.0
        %455 = vmatpush2.msra.mxu0 0.0
        %456 = vmatprep.subr.mxu0 0.0
        %457 = vmatpush2.msra.mxu0 0.0
        %458 = vmatprep.subr.mxu0 0.0
        %459 = vmatpush2.msra.mxu0 0.0
        %460 = vmatprep.subr.mxu0 0.0
        %461 = vmatpush2.msra.mxu0 0.0
        %462 = vmatprep.subr.mxu0 0.0
        %463 = vmatpush2.msra.mxu0 0.0
        %464 = vmatprep.subr.mxu0 0.0
        %465 = vmatpush2.msra.mxu0 0.0
        %466 = vmatprep.subr.mxu0 0.0
        %467 = vmatpush2.msra.mxu0 0.0
        %468 = vmatprep.subr.mxu0 0.0
        %469 = vmatpush2.msra.mxu0 0.0
        %470 = vmatprep.subr.mxu0 0.0
        %471 = vmatpush2.msra.mxu0 0.0
        %472 = vmatprep.subr.mxu0 0.0
        %473 = vmatpush2.msra.mxu0 0.0
        %474 = vmatprep.subr.mxu0 0.0
        %475 = vmatpush2.msra.mxu0 0.0
        %476 = vmatprep.subr.mxu0 0.0
        %477 = vmatpush2.msra.mxu0 0.0
        %478 = vmatprep.subr.mxu0 0.0
        %479 = vmatpush2.msra.mxu0 0.0
        %480 = vmatprep.subr.mxu0 0.0
        %481 = vmatpush2.msra.mxu0 0.0
        %482 = vmatprep.subr.mxu0 0.0
        %483 = vmatpush2.msra.mxu0 0.0
        %484 = vmatprep.subr.mxu0 0.0
        %485 = vmatpush2.msra.mxu0 0.0
        %486 = vmatprep.mubr.f32.mxu0 0.0
        %487 = vmatmul.mubr.f32.gmra.mxu0 %v380
        %v488 = vpop.f32.mrf.mxu0
        %v489 = vadd.f32 0.0, %v488
        %v490 = vpop.f32.mrf.mxu0
        %491 = vmatprep.mubr.f32.mxu0 0.0
        %492 = vmatmul.mubr.f32.gmra.mxu0 %v383
        %v493 = vpop.f32.mrf.mxu0
        %v494 = vadd.f32 0.0, %v493
        %v495 = vpop.f32.mrf.mxu0
        %496 = vmatprep.mubr.f32.mxu0 0.0
        %497 = vmatmul.mubr.f32.gmra.mxu0 %v386
        %v498 = vpop.f32.mrf.mxu0
        %v499 = vadd.f32 0.0, %v498
        %v500 = vpop.f32.mrf.mxu0
        %501 = vmatprep.mubr.f32.mxu0 0.0
        %502 = vmatmul.mubr.f32.gmra.mxu0 %v389
        %v503 = vpop.f32.mrf.mxu0
        %v504 = vadd.f32 0.0, %v503
        %v505 = vpop.f32.mrf.mxu0
        %506 = vmatprep.mubr.f32.mxu0 0.0
        %507 = vmatmul.mubr.f32.gmra.mxu0 %v392
        %v508 = vpop.f32.mrf.mxu0
        %v509 = vadd.f32 0.0, %v508
        %v510 = vpop.f32.mrf.mxu0
        %511 = vmatprep.mubr.f32.mxu0 0.0
        %512 = vmatmul.mubr.f32.gmra.mxu0 %v395
        %v513 = vpop.f32.mrf.mxu0
        %v514 = vadd.f32 0.0, %v513
        %v515 = vpop.f32.mrf.mxu0
        %516 = vmatprep.mubr.f32.mxu0 0.0
        %517 = vmatmul.mubr.f32.gmra.mxu0 %v398
        %v518 = vpop.f32.mrf.mxu0
        %v519 = vadd.f32 0.0, %v518
        %v520 = vpop.f32.mrf.mxu0
        %521 = vmatprep.mubr.f32.mxu0 0.0
        %522 = vmatmul.mubr.f32.gmra.mxu0 %v401
        %v523 = vpop.f32.mrf.mxu0
        %v524 = vadd.f32 0.0, %v523
        %v525 = vpop.f32.mrf.mxu0
        %526 = vmatprep.mubr.f32.mxu0 0.0
        %527 = vmatmul.mubr.f32.gmra.mxu0 %v404
        %v528 = vpop.f32.mrf.mxu0
        %v529 = vadd.f32 0.0, %v528
        %v530 = vpop.f32.mrf.mxu0
        %531 = vmatprep.mubr.f32.mxu0 0.0
        %532 = vmatmul.mubr.f32.gmra.mxu0 %v407
        %v533 = vpop.f32.mrf.mxu0
        %v534 = vadd.f32 0.0, %v533
        %v535 = vpop.f32.mrf.mxu0
        %536 = vmatprep.mubr.f32.mxu0 0.0
        %537 = vmatmul.mubr.f32.gmra.mxu0 %v410
        %v538 = vpop.f32.mrf.mxu0
        %v539 = vadd.f32 0.0, %v538
        %v540 = vpop.f32.mrf.mxu0
        %541 = vmatprep.mubr.f32.mxu0 0.0
        %542 = vmatmul.mubr.f32.gmra.mxu0 %v413
        %v543 = vpop.f32.mrf.mxu0
        %v544 = vadd.f32 0.0, %v543
        %v545 = vpop.f32.mrf.mxu0
        %546 = vmatprep.mubr.f32.mxu0 0.0
        %547 = vmatmul.mubr.f32.gmra.mxu0 %v416
        %v548 = vpop.f32.mrf.mxu0
        %v549 = vadd.f32 0.0, %v548
        %v550 = vpop.f32.mrf.mxu0
        %551 = vdwg.mxu0
        %v552 = vld [vmem:[#allocation6] sm:$0xff]
        %v553 = vld [vmem:[#allocation6 + $0x8] sm:$0xff]
        %v554 = vld [vmem:[#allocation6 + $0x10] sm:$0xff]
        %v555 = vld [vmem:[#allocation6 + $0x18] sm:$0xff]
        %v556 = vld [vmem:[#allocation6 + $0x20] sm:$0xff]
        %v557 = vld [vmem:[#allocation6 + $0x28] sm:$0xff]
        %v558 = vld [vmem:[#allocation6 + $0x30] sm:$0xff]
        %v559 = vld [vmem:[#allocation6 + $0x38] sm:$0xff]
        %v560 = vld [vmem:[#allocation6 + $0x40] sm:$0xff]
        %v561 = vld [vmem:[#allocation6 + $0x48] sm:$0xff]
        %v562 = vld [vmem:[#allocation6 + $0x50] sm:$0xff]
        %v563 = vld [vmem:[#allocation6 + $0x58] sm:$0xff]
        %v564 = vld [vmem:[#allocation6 + $0x60] sm:$0xf]
        %565 = vset.pattern.permute.xlu0 0
        %566 = vperm.xlu0 %565, %v552
        %v567 = vpop.permute.xlu0 %566
        %568 = vset.pattern.permute.xlu0 0
        %569 = vperm.xlu0 %568, %v553
        %v570 = vpop.permute.xlu0 %569
        %571 = vset.pattern.permute.xlu0 0
        %572 = vperm.xlu0 %571, %v554
        %v573 = vpop.permute.xlu0 %572
        %574 = vset.pattern.permute.xlu0 0
        %575 = vperm.xlu0 %574, %v555
        %v576 = vpop.permute.xlu0 %575
        %577 = vset.pattern.permute.xlu0 0
        %578 = vperm.xlu0 %577, %v556
        %v579 = vpop.permute.xlu0 %578
        %580 = vset.pattern.permute.xlu0 0
        %581 = vperm.xlu0 %580, %v557
        %v582 = vpop.permute.xlu0 %581
        %583 = vset.pattern.permute.xlu0 0
        %584 = vperm.xlu0 %583, %v558
        %v585 = vpop.permute.xlu0 %584
        %586 = vset.pattern.permute.xlu0 0
        %587 = vperm.xlu0 %586, %v559
        %v588 = vpop.permute.xlu0 %587
        %589 = vset.pattern.permute.xlu0 0
        %590 = vperm.xlu0 %589, %v560
        %v591 = vpop.permute.xlu0 %590
        %592 = vset.pattern.permute.xlu0 0
        %593 = vperm.xlu0 %592, %v561
        %v594 = vpop.permute.xlu0 %593
        %595 = vset.pattern.permute.xlu0 0
        %596 = vperm.xlu0 %595, %v562
        %v597 = vpop.permute.xlu0 %596
        %598 = vset.pattern.permute.xlu0 0
        %599 = vperm.xlu0 %598, %v563
        %v600 = vpop.permute.xlu0 %599
        %601 = vset.pattern.permute.xlu0 0
        %602 = vperm.xlu0 %601, %v564
        %v603 = vpop.permute.xlu0 %602
        %v604 = vlaneseq
        %v605 = vshrl.u32 %v604, 7
        %v606 = vsub.s32 0, %v605
        %v607 = vrot.slane %v364, %v606
        %vm608 = vcmp.eq.s32.totalorder %v567, %v607
        %vm609 = vcmp.eq.s32.totalorder %v570, %v607
        %vm610 = vcmp.eq.s32.totalorder %v573, %v607
        %vm611 = vcmp.eq.s32.totalorder %v576, %v607
        %vm612 = vcmp.eq.s32.totalorder %v579, %v607
        %vm613 = vcmp.eq.s32.totalorder %v582, %v607
        %vm614 = vcmp.eq.s32.totalorder %v585, %v607
        %vm615 = vcmp.eq.s32.totalorder %v588, %v607
        %vm616 = vcmp.eq.s32.totalorder %v591, %v607
        %vm617 = vcmp.eq.s32.totalorder %v594, %v607
        %vm618 = vcmp.eq.s32.totalorder %v597, %v607
        %vm619 = vcmp.eq.s32.totalorder %v600, %v607
        %vm620 = vcmp.eq.s32.totalorder %v603, %v607
        %v621 = vsel %vm608, %v489, 0.0
        %v622 = vsel %vm609, %v494, 0.0
        %v623 = vsel %vm610, %v499, 0.0
        %v624 = vsel %vm611, %v504, 0.0
        %v625 = vsel %vm612, %v509, 0.0
        %v626 = vsel %vm613, %v514, 0.0
        %v627 = vsel %vm614, %v519, 0.0
        %v628 = vsel %vm615, %v524, 0.0
        %v629 = vsel %vm616, %v529, 0.0
        %v630 = vsel %vm617, %v534, 0.0
        %v631 = vsel %vm618, %v539, 0.0
        %v632 = vsel %vm619, %v544, 0.0
        %v633 = vsel %vm620, %v549, 0.0
        %v634 = vld [vmem:[%s4] sm:$0xff]
        %v635 = vld [vmem:[%s4 + $0x8] sm:$0xff]
        %v636 = vld [vmem:[%s4 + $0x10] sm:$0xf]
        %vm637 = vcmask 818176
        %v639 = vsel %vm637, %v634, 0
        %v642 = vsel %vm637, %v635, 0
        %v645 = vsel %vm637, %v636, 0
        %vm647 = vcmask 1043456
        %v649 = vsel %vm647, %v633, 0
        %651 = vmatprep.subr.mxu0 0.0
        %652 = vmatpush1.msra.mxu0 0.0
        %653 = vmatprep.subr.mxu0 0.0
        %654 = vmatpush1.msra.mxu0 0.0
        %655 = vmatprep.subr.mxu0 0.0
        %656 = vmatpush1.msra.mxu0 0.0
        %657 = vmatprep.subr.mxu0 0.0
        %658 = vmatpush1.msra.mxu0 %v649
        %659 = vmatprep.subr.mxu0 0.0
        %660 = vmatpush1.msra.mxu0 %v632
        %661 = vmatprep.subr.mxu0 0.0
        %662 = vmatpush1.msra.mxu0 %v631
        %663 = vmatprep.subr.mxu0 0.0
        %664 = vmatpush1.msra.mxu0 %v630
        %665 = vmatprep.subr.mxu0 0.0
        %666 = vmatpush1.msra.mxu0 %v629
        %667 = vmatprep.subr.mxu0 0.0
        %668 = vmatpush1.msra.mxu0 %v628
        %669 = vmatprep.subr.mxu0 0.0
        %670 = vmatpush1.msra.mxu0 %v627
        %671 = vmatprep.subr.mxu0 0.0
        %672 = vmatpush1.msra.mxu0 %v626
        %673 = vmatprep.subr.mxu0 0.0
        %674 = vmatpush1.msra.mxu0 %v625
        %675 = vmatprep.subr.mxu0 0.0
        %676 = vmatpush1.msra.mxu0 %v624
        %677 = vmatprep.subr.mxu0 0.0
        %678 = vmatpush1.msra.mxu0 %v623
        %679 = vmatprep.subr.mxu0 0.0
        %680 = vmatpush1.msra.mxu0 %v622
        %681 = vmatprep.subr.mxu0 0.0
        %682 = vmatpush1.msra.mxu0 %v621
        %683 = vmatprep.subr.mxu0 0.0
        %684 = vmatpush2.msra.mxu0 0.0
        %685 = vmatprep.subr.mxu0 0.0
        %686 = vmatpush2.msra.mxu0 0.0
        %687 = vmatprep.subr.mxu0 0.0
        %688 = vmatpush2.msra.mxu0 0.0
        %689 = vmatprep.subr.mxu0 0.0
        %690 = vmatpush2.msra.mxu0 0.0
        %691 = vmatprep.subr.mxu0 0.0
        %692 = vmatpush2.msra.mxu0 0.0
        %693 = vmatprep.subr.mxu0 0.0
        %694 = vmatpush2.msra.mxu0 0.0
        %695 = vmatprep.subr.mxu0 0.0
        %696 = vmatpush2.msra.mxu0 0.0
        %697 = vmatprep.subr.mxu0 0.0
        %698 = vmatpush2.msra.mxu0 0.0
        %699 = vmatprep.subr.mxu0 0.0
        %700 = vmatpush2.msra.mxu0 0.0
        %701 = vmatprep.subr.mxu0 0.0
        %702 = vmatpush2.msra.mxu0 0.0
        %703 = vmatprep.subr.mxu0 0.0
        %704 = vmatpush2.msra.mxu0 0.0
        %705 = vmatprep.subr.mxu0 0.0
        %706 = vmatpush2.msra.mxu0 0.0
        %707 = vmatprep.subr.mxu0 0.0
        %708 = vmatpush2.msra.mxu0 0.0
        %709 = vmatprep.subr.mxu0 0.0
        %710 = vmatpush2.msra.mxu0 0.0
        %711 = vmatprep.subr.mxu0 0.0
        %712 = vmatpush2.msra.mxu0 0.0
        %713 = vmatprep.subr.mxu0 0.0
        %714 = vmatpush2.msra.mxu0 0.0
        %715 = vmatprep.mubr.f32.mxu0 0.0
        %716 = vmatmul.mubr.f32.gmra.mxu0 %v639
        %v717 = vpop.f32.mrf.mxu0
        %v718 = vadd.f32 0.0, %v717
        %v719 = vpop.f32.mrf.mxu0
        %720 = vmatprep.mubr.f32.mxu0 0.0
        %721 = vmatmul.mubr.f32.gmra.mxu0 %v642
        %v722 = vpop.f32.mrf.mxu0
        %v723 = vadd.f32 0.0, %v722
        %v724 = vpop.f32.mrf.mxu0
        %725 = vmatprep.mubr.f32.mxu0 0.0
        %726 = vmatmul.mubr.f32.gmra.mxu0 %v645
        %v727 = vpop.f32.mrf.mxu0
        %v728 = vadd.f32 0.0, %v727
        %v729 = vpop.f32.mrf.mxu0
        %730 = vdwg.mxu0
        %v731 = vmax.f32 %v718, 0.0
        %v732 = vmax.f32 %v723, 0.0
        %v733 = vmax.f32 %v728, 0.0
        %v734 = vld [vmem:[%s5] sm:$0x1]
        %v735 = vld [vmem:[#allocation2] sm:$0x1]
        %737 = vset.pattern.permute.xlu0 0
        %738 = vperm.xlu0 %737, %v735
        %v739 = vpop.permute.xlu0 %738
        %v741 = vlaneseq
        %v742 = vshrl.u32 %v741, 7
        %v743 = vsub.s32 0, %v742
        %v744 = vrot.slane %v739, %v743
        %vm745 = vcmask 162816
        %v747 = vsel %vm745, %v734, 0
        %v750 = vsel %vm647, %v733, 0
        %752 = vmatprep.subr.mxu0 0.0
        %753 = vmatpush1.msra.mxu0 0.0
        %754 = vmatprep.subr.mxu0 0.0
        %755 = vmatpush1.msra.mxu0 0.0
        %756 = vmatprep.subr.mxu0 0.0
        %757 = vmatpush1.msra.mxu0 0.0
        %758 = vmatprep.subr.mxu0 0.0
        %759 = vmatpush1.msra.mxu0 0.0
        %760 = vmatprep.subr.mxu0 0.0
        %761 = vmatpush1.msra.mxu0 0.0
        %762 = vmatprep.subr.mxu0 0.0
        %763 = vmatpush1.msra.mxu0 0.0
        %764 = vmatprep.subr.mxu0 0.0
        %765 = vmatpush1.msra.mxu0 0.0
        %766 = vmatprep.subr.mxu0 0.0
        %767 = vmatpush1.msra.mxu0 0.0
        %768 = vmatprep.subr.mxu0 0.0
        %769 = vmatpush1.msra.mxu0 0.0
        %770 = vmatprep.subr.mxu0 0.0
        %771 = vmatpush1.msra.mxu0 0.0
        %772 = vmatprep.subr.mxu0 0.0
        %773 = vmatpush1.msra.mxu0 0.0
        %774 = vmatprep.subr.mxu0 0.0
        %775 = vmatpush1.msra.mxu0 0.0
        %776 = vmatprep.subr.mxu0 0.0
        %777 = vmatpush1.msra.mxu0 0.0
        %778 = vmatprep.subr.mxu0 0.0
        %779 = vmatpush1.msra.mxu0 %v750
        %780 = vmatprep.subr.mxu0 0.0
        %781 = vmatpush1.msra.mxu0 %v732
        %782 = vmatprep.subr.mxu0 0.0
        %783 = vmatpush1.msra.mxu0 %v731
        %784 = vmatprep.subr.mxu0 0.0
        %785 = vmatpush2.msra.mxu0 0.0
        %786 = vmatprep.subr.mxu0 0.0
        %787 = vmatpush2.msra.mxu0 0.0
        %788 = vmatprep.subr.mxu0 0.0
        %789 = vmatpush2.msra.mxu0 0.0
        %790 = vmatprep.subr.mxu0 0.0
        %791 = vmatpush2.msra.mxu0 0.0
        %792 = vmatprep.subr.mxu0 0.0
        %793 = vmatpush2.msra.mxu0 0.0
        %794 = vmatprep.subr.mxu0 0.0
        %795 = vmatpush2.msra.mxu0 0.0
        %796 = vmatprep.subr.mxu0 0.0
        %797 = vmatpush2.msra.mxu0 0.0
        %798 = vmatprep.subr.mxu0 0.0
        %799 = vmatpush2.msra.mxu0 0.0
        %800 = vmatprep.subr.mxu0 0.0
        %801 = vmatpush2.msra.mxu0 0.0
        %802 = vmatprep.subr.mxu0 0.0
        %803 = vmatpush2.msra.mxu0 0.0
        %804 = vmatprep.subr.mxu0 0.0
        %805 = vmatpush2.msra.mxu0 0.0
        %806 = vmatprep.subr.mxu0 0.0
        %807 = vmatpush2.msra.mxu0 0.0
        %808 = vmatprep.subr.mxu0 0.0
        %809 = vmatpush2.msra.mxu0 0.0
        %810 = vmatprep.subr.mxu0 0.0
        %811 = vmatpush2.msra.mxu0 0.0
        %812 = vmatprep.subr.mxu0 0.0
        %813 = vmatpush2.msra.mxu0 0.0
        %814 = vmatprep.subr.mxu0 0.0
        %815 = vmatpush2.msra.mxu0 0.0
        %816 = vmatprep.mubr.f32.mxu0 0.0
        %817 = vmatmul.mubr.f32.gmra.mxu0 %v747
        %v818 = vpop.f32.mrf.mxu0
        %v819 = vadd.f32 %v744, %v818
        %v820 = vpop.f32.mrf.mxu0
        %821 = vdwg.mxu0
        %v822 = vmax.f32 %v819, 0.0
        %v823 = vand.u32 2147483647, %v819
        %v824 = vsub.f32 0.0, %v823
        %v825 = vmul.f32 %v824, 1.442695
        %v826 = vpow.pop %v825
        %v827 = vadd.f32 %v826, 1.0
        %v828 = vlog2.pop %v827
        %v829 = vmul.f32 %v828, 0.6931472
        %v830 = vadd.f32 %v822, %v829
        %v831 = vsub.f32 0.0, %v830
        %v832 = vsub.f32 %v819, %v830
        %v834 = vrot.slane %v832, 7
        %vm836 = vcmask 1040384
        %v837 = vsel %vm836, %v831, %v834
        %838 = vst [vmem:[%s361] sm:$0x3] %v837
        %p839 = scmp.lt.s32.totalorder %s22, 1
        %s840 = scalar_select %p839, %s22, 1
        %s841 = smul.addr %s840, 2
        %s842 = scalar_lea.vmem %s7, %s841
        // Predicated region
        $region95: #{forward.1} parent=81 // pred_check
          %p843 = pneg %p197
        $region96: #{forward.1} parent=81 // pred_check_branch
          %845 = sbr.rel (%p843) target = $region98
        $region97: #{forward.1} parent=81 // pred_region
          _
        $region98: #{forward.1} parent=81 // pred_fallthru
          _
      $region82: #{forward.1} parent=5 // pred_fallthru
        _
      %p846 = scmp.le.s32.totalorder 2, %s17
      // Predicated region
      $region99: #{forward.1} parent=5 // pred_check
        %p847 = pneg %p846
      $region100: #{forward.1} parent=5 // pred_check_branch
        %849 = sbr.rel (%p847) target = $region102
      $region101: #{forward.1} parent=5 // pred_region
        %s850 = ssub.s32 %s17, 2
        // Predicated region
        $region103: #{forward.1} parent=101 // pred_check
          %p851 = pneg %p203
        $region104: #{forward.1} parent=101 // pred_check_branch
          %853 = sbr.rel (%p851) target = $region106
        $region105: #{forward.1} parent=101 // pred_region
          %p854 = scmp.lt.s32.totalorder %s23, 1
          %s855 = scalar_select %p854, %s23, 1
          %s856 = smul.addr %s855, 2
          %s857 = scalar_lea.vmem %s7, %s856
        $region106: #{forward.1} parent=101 // pred_fallthru
          _
      $region102: #{forward.1} parent=5 // pred_fallthru
        _
    $region6: #{forward.1} parent=1 // loop_footer
      %s21 = sadd.s32 1, %s17
    $region7: #{forward.1} parent=1 // loop_footer_branch
      %16 = sbr.rel target = $region3
    $region8: #{forward.1} parent=1 // loop_exit
      _
    %858 = vsyncpa [#allocation5], 1
    %s859 = scalar_lea.sflag [#allocation5], 1
    %860 = vsyncpa %s859, 1
    %861 = vsyncpa [#allocation7], 1

</llo_original>
